<compile_context>
chip_gen: v5e
topology: v5e:2x2
jax: 0.10.0
libtpu: 0.0.40
codegen_flags: <defaults>
</compile_context>

<pallas_src>
import math

import jax
import jax.numpy as jnp
from jax.experimental import pallas as pl
from jax.experimental.pallas import tpu as pltpu

# ---------------- small config (real model values in parens) ----------------
B = 2                        # batch (clouds)
MAX_LEN = 7                  # voxels per cloud            (759)
SEQ = MAX_LEN + 1            # sequence length incl. cls   (760 -> pad 768)
D = 128                      # model dim                   (760 -> pad 768)
HEADS = 4                    # heads                       (8)
DIM_HEAD = 32                # per-head dim                (64)
INNER = HEADS * DIM_HEAD     # 128 — lane aligned          (512)
SCALE = DIM_HEAD ** -0.5
NEG_INF = -1e9               # masked_fill_ value used by the PyTorch code
TQ = SEQ                     # query tile; == SEQ at toy config (128-256 at real config)


# ---------------------------------------------------------------- kernel ---
def _attn_kernel(xq_ref, xkv_ref, wq_ref, wk_ref, wv_ref, bias_ref, wo_ref, bo_ref,
                 o_ref):
    """Fused QKV + masked attention + head-contracted output projection.

    One grid step handles one (batch, q-tile, head):
      xq  : [TQ,  D]        bf16   query-row slab of x
      xkv : [SEQ, D]        bf16   full-sequence x (keys/values), cached across q/h
      wq  : [D, DIM_HEAD]   bf16   per-head q weights (SCALE pre-folded)
      wk  : [D, DIM_HEAD]   bf16
      wv  : [D, DIM_HEAD]   bf16
      bias: [1, SEQ]        f32    additive key-padding mask (0 or -1e9)
      wo  : [DIM_HEAD, D]   bf16   per-head rows of the output projection
      bo  : [1, D]          f32
      o   : [TQ, D]         f32    accumulated across the head grid axis
    """
    h = pl.program_id(2)

    # --- fused per-head QKV projection (bf16 MXU, f32 accumulation) ---
    q = jnp.dot(xq_ref[...], wq_ref[...],
                preferred_element_type=jnp.float32).astype(jnp.bfloat16)   # [TQ, dh]
    k = jnp.dot(xkv_ref[...], wk_ref[...],
                preferred_element_type=jnp.float32).astype(jnp.bfloat16)   # [SEQ, dh]
    v = jnp.dot(xkv_ref[...], wv_ref[...],
                preferred_element_type=jnp.float32).astype(jnp.bfloat16)   # [SEQ, dh]

    # --- masked logits + softmax (f32) ---
    logits = jnp.einsum('qd,kd->qk', q, k,
                        preferred_element_type=jnp.float32)                # [TQ, SEQ]
    logits = logits + bias_ref[...]                                        # key-pad mask
    logits = logits - jnp.max(logits, axis=-1, keepdims=True)              # stable softmax
    p = jnp.exp(logits)
    p = p * pl.reciprocal(jnp.sum(p, axis=-1, keepdims=True), approx=True)

    # --- attention-weighted values, then head-contracted output projection ---
    out_h = jnp.dot(p.astype(jnp.bfloat16), v,
                    preferred_element_type=jnp.float32)                    # [TQ, dh]
    contrib = jnp.dot(out_h.astype(jnp.bfloat16), wo_ref[...],
                      preferred_element_type=jnp.float32)                  # [TQ, D]

    # accumulate across heads directly in the (VMEM-resident) f32 output block
    @pl.when(h == 0)
    def _():
        o_ref[...] = contrib + bo_ref[...]

    @pl.when(h != 0)
    def _():
        o_ref[...] = o_ref[...] + contrib


# --------------------------------------------------------------- wrapper ---
def mhsa(x_bf16, bias, wq, wk, wv, wo, bo):
    b, s, _ = x_bf16.shape
    q_tiles = s // TQ
    grid = (b, q_tiles, HEADS)

    in_specs = [
        pl.BlockSpec((None, TQ, D), lambda i, j, h: (i, j, 0)),          # x (query rows)
        pl.BlockSpec((None, SEQ, D), lambda i, j, h: (i, 0, 0)),         # x (key/value rows)
        pl.BlockSpec((None, D, DIM_HEAD), lambda i, j, h: (h, 0, 0)),    # wq (scaled)
        pl.BlockSpec((None, D, DIM_HEAD), lambda i, j, h: (h, 0, 0)),    # wk
        pl.BlockSpec((None, D, DIM_HEAD), lambda i, j, h: (h, 0, 0)),    # wv
        pl.BlockSpec((None, 1, SEQ), lambda i, j, h: (i, 0, 0)),         # additive key mask
        pl.BlockSpec((None, DIM_HEAD, D), lambda i, j, h: (h, 0, 0)),    # wo per-head rows
        pl.BlockSpec((1, D), lambda i, j, h: (0, 0)),                    # bo
    ]
    return pl.pallas_call(
        _attn_kernel,
        grid=grid,
        in_specs=in_specs,
        out_specs=pl.BlockSpec((None, TQ, D), lambda i, j, h: (i, j, 0)),
        out_shape=jax.ShapeDtypeStruct((b, s, D), jnp.float32),
        compiler_params=pltpu.CompilerParams(
            dimension_semantics=("parallel", "parallel", "arbitrary"),
            vmem_limit_bytes=48 * 1024 * 1024,   # sized for v7x's 64 MiB physical VMEM
        ),
    )(x_bf16, x_bf16, wq, wk, wv, bias, wo, bo)


# ------------------------------------------------------------- parameters --
def init_params(key):
    k1, k2 = jax.random.split(key)

    def lin(k, fan_in, fan_out, bias=True):
        bound = 1.0 / math.sqrt(fan_in)
        kw, kb = jax.random.split(k)
        w = jax.random.uniform(kw, (fan_in, fan_out), jnp.float32, -bound, bound)
        b_ = jax.random.uniform(kb, (fan_out,), jnp.float32, -bound, bound) if bias else None
        return w, b_

    wqkv, _ = lin(k1, D, 3 * INNER, bias=False)       # to_qkv (bias=False)
    wo, bo = lin(k2, INNER, D, bias=True)             # to_out[0] Linear

    # One-time host-side reorganization (matches torch chunk(3) + rearrange orders):
    #   qkv columns are (three, head, dh); to_out rows are (head, dh).
    wqkv3 = wqkv.reshape(D, 3, HEADS, DIM_HEAD)
    wq = jnp.transpose(wqkv3[:, 0], (1, 0, 2)) * SCALE    # SCALE folded into q weights
    wk = jnp.transpose(wqkv3[:, 1], (1, 0, 2))
    wv = jnp.transpose(wqkv3[:, 2], (1, 0, 2))
    wo_h = wo.reshape(HEADS, DIM_HEAD, D)

    return dict(
        wq=wq.astype(jnp.bfloat16),                   # bf16 weights, f32 MXU accumulation
        wk=wk.astype(jnp.bfloat16),
        wv=wv.astype(jnp.bfloat16),
        wo=wo_h.astype(jnp.bfloat16),
        bo=bo.reshape(1, D).astype(jnp.float32),
    )


# ---------------------------------------------------------------- forward --
def attention_forward(params, x, voxel_sequence, cloud_len_list):
    """
    x:               [B, SEQ, D]      float32 (cls token + voxel tokens)
    voxel_sequence:  [B, SEQ-1]       float32 (0.0 == padded voxel)
    cloud_len_list:  [B]              int32
    """
    # TODO(synk): scalar-prefetch cloud_len_list (PrefetchScalarGridSpec) to bound the
    # k-tile loop / skip fully-masked key tiles once flash k-tiling lands at SEQ=760.
    _ = cloud_len_list  # get_attn_pad_mask itself does not use it
    b, s, _d = x.shape

    # --- get_attn_pad_mask -> additive key-padding bias (computed once, f32) ---
    vsp1 = jnp.concatenate([jnp.ones((b, 1), jnp.float32), voxel_sequence], axis=1)   # [b, s]
    bias = jnp.where(vsp1 == 0.0, jnp.float32(NEG_INF), jnp.float32(0.0))[:, None, :]  # [b,1,s]

    # bf16 activations into the kernel (upstream layer should ideally emit bf16 directly)
    x_bf16 = x.astype(jnp.bfloat16)

    # fused QKV + masked MHSA + to_out (Dropout == identity at inference)
    return mhsa(x_bf16, bias, params["wq"], params["wk"], params["wv"],
                params["wo"], params["bo"])                                # [b, s, D] f32


# ------------------------------------------------------------------- main --
if __name__ == "__main__":
    key = jax.random.PRNGKey(0)
    k_x, k_seq, k_par = jax.random.split(key, 3)

    cloud_len_list = jnp.array([5, 7], dtype=jnp.int32)               # valid voxels per cloud
    valid = jnp.arange(MAX_LEN)[None, :] < cloud_len_list[:, None]
    seq_vals = jax.random.randint(k_seq, (B, MAX_LEN), 1, MAX_LEN + 1).astype(jnp.float32)
    voxel_sequence = jnp.where(valid, seq_vals, 0.0)                  # 0.0 == padding

    x = jax.random.normal(k_x, (B, SEQ, D), jnp.float32)              # [cls | voxel tokens]
    params = init_params(k_par)

    out = attention_forward(params, x, voxel_sequence, cloud_len_list)
    jax.block_until_ready(out)
    assert out.shape == (B, SEQ, D) and out.dtype == jnp.float32
    assert bool(jnp.all(jnp.isfinite(out)))
    print("KERNEL_OK")
</pallas_src>

<mosaic_0001>
module attributes {stable_mosaic.version = 11 : i64} {
  func.func @_attn_kernel(%arg0: i32, %arg1: i32, %arg2: i32, %arg3: memref<1x8x128xbf16, #tpu.memory_space<vmem>>, %arg4: memref<1x8x128xbf16, #tpu.memory_space<vmem>>, %arg5: memref<1x128x32xbf16, #tpu.memory_space<vmem>>, %arg6: memref<1x128x32xbf16, #tpu.memory_space<vmem>>, %arg7: memref<1x128x32xbf16, #tpu.memory_space<vmem>>, %arg8: memref<1x1x8xf32, #tpu.memory_space<vmem>>, %arg9: memref<1x32x128xbf16, #tpu.memory_space<vmem>>, %arg10: memref<1x128xf32, #tpu.memory_space<vmem>>, %arg11: memref<1x8x128xf32, #tpu.memory_space<vmem>>) attributes {dimension_semantics = [#tpu.dimension_semantics<parallel>, #tpu.dimension_semantics<parallel>, #tpu.dimension_semantics<arbitrary>], iteration_bounds = array<i64: 2, 1, 4>, scalar_prefetch = 0 : i64, scratch_operands = 0 : i64, tpu.core_type = #tpu.core_type<tc>, window_params = [{transform_indices = @transform_0, window_bounds = array<i64: 1, 8, 128>}, {transform_indices = @transform_1, window_bounds = array<i64: 1, 8, 128>}, {transform_indices = @transform_2, window_bounds = array<i64: 1, 128, 32>}, {transform_indices = @transform_3, window_bounds = array<i64: 1, 128, 32>}, {transform_indices = @transform_4, window_bounds = array<i64: 1, 128, 32>}, {transform_indices = @transform_5, window_bounds = array<i64: 1, 1, 8>}, {transform_indices = @transform_6, window_bounds = array<i64: 1, 32, 128>}, {pipeline_mode = #tpu.pipeline_mode<synchronous>, transform_indices = @transform_7, window_bounds = array<i64: 1, 128>}, {transform_indices = @transform_8, window_bounds = array<i64: 1, 8, 128>}]} {
    %c0 = arith.constant 0 : index
    %c0_0 = arith.constant 0 : index
    %c0_1 = arith.constant 0 : index
    %0 = vector.load %arg3[%c0, %c0_0, %c0_1] : memref<1x8x128xbf16, #tpu.memory_space<vmem>>, vector<1x8x128xbf16>
    %1 = vector.shape_cast %0 : vector<1x8x128xbf16> to vector<8x128xbf16>
    %c0_2 = arith.constant 0 : index
    %c0_3 = arith.constant 0 : index
    %c0_4 = arith.constant 0 : index
    %2 = vector.load %arg5[%c0_2, %c0_3, %c0_4] : memref<1x128x32xbf16, #tpu.memory_space<vmem>>, vector<1x128x32xbf16>
    %3 = vector.shape_cast %2 : vector<1x128x32xbf16> to vector<128x32xbf16>
    %cst = arith.constant dense<0.000000e+00> : vector<8x32xf32>
    %4 = tpu.matmul %1, %3, %cst {dimension_numbers = #tpu.dot_dimension_numbers<[1], [0], [0], [1], [0, 0, 1, 1], [], []>} : vector<8x128xbf16>, vector<128x32xbf16>, vector<8x32xf32> -> vector<8x32xf32>
    %5 = arith.truncf %4 : vector<8x32xf32> to vector<8x32xbf16>
    %c0_5 = arith.constant 0 : index
    %c0_6 = arith.constant 0 : index
    %c0_7 = arith.constant 0 : index
    %6 = vector.load %arg4[%c0_5, %c0_6, %c0_7] : memref<1x8x128xbf16, #tpu.memory_space<vmem>>, vector<1x8x128xbf16>
    %7 = vector.shape_cast %6 : vector<1x8x128xbf16> to vector<8x128xbf16>
    %c0_8 = arith.constant 0 : index
    %c0_9 = arith.constant 0 : index
    %c0_10 = arith.constant 0 : index
    %8 = vector.load %arg6[%c0_8, %c0_9, %c0_10] : memref<1x128x32xbf16, #tpu.memory_space<vmem>>, vector<1x128x32xbf16>
    %9 = vector.shape_cast %8 : vector<1x128x32xbf16> to vector<128x32xbf16>
    %cst_11 = arith.constant dense<0.000000e+00> : vector<8x32xf32>
    %10 = tpu.matmul %7, %9, %cst_11 {dimension_numbers = #tpu.dot_dimension_numbers<[1], [0], [0], [1], [0, 0, 1, 1], [], []>} : vector<8x128xbf16>, vector<128x32xbf16>, vector<8x32xf32> -> vector<8x32xf32>
    %11 = arith.truncf %10 : vector<8x32xf32> to vector<8x32xbf16>
    %c0_12 = arith.constant 0 : index
    %c0_13 = arith.constant 0 : index
    %c0_14 = arith.constant 0 : index
    %12 = vector.load %arg4[%c0_12, %c0_13, %c0_14] : memref<1x8x128xbf16, #tpu.memory_space<vmem>>, vector<1x8x128xbf16>
    %13 = vector.shape_cast %12 : vector<1x8x128xbf16> to vector<8x128xbf16>
    %c0_15 = arith.constant 0 : index
    %c0_16 = arith.constant 0 : index
    %c0_17 = arith.constant 0 : index
    %14 = vector.load %arg7[%c0_15, %c0_16, %c0_17] : memref<1x128x32xbf16, #tpu.memory_space<vmem>>, vector<1x128x32xbf16>
    %15 = vector.shape_cast %14 : vector<1x128x32xbf16> to vector<128x32xbf16>
    %cst_18 = arith.constant dense<0.000000e+00> : vector<8x32xf32>
    %16 = tpu.matmul %13, %15, %cst_18 {dimension_numbers = #tpu.dot_dimension_numbers<[1], [0], [0], [1], [0, 0, 1, 1], [], []>} : vector<8x128xbf16>, vector<128x32xbf16>, vector<8x32xf32> -> vector<8x32xf32>
    %17 = arith.truncf %16 : vector<8x32xf32> to vector<8x32xbf16>
    "tpu.trace_start"() <{level = 10 : i32, message = "qd,kd->qk"}> : () -> ()
    %cst_19 = arith.constant dense<0.000000e+00> : vector<8x8xf32>
    %18 = tpu.matmul %5, %11, %cst_19 {dimension_numbers = #tpu.dot_dimension_numbers<[1], [1], [0], [0], [0, 0, 1, 0], [], []>} : vector<8x32xbf16>, vector<8x32xbf16>, vector<8x8xf32> -> vector<8x8xf32>
    "tpu.trace_stop"() : () -> ()
    %c0_20 = arith.constant 0 : index
    %c0_21 = arith.constant 0 : index
    %c0_22 = arith.constant 0 : index
    %19 = vector.load %arg8[%c0_20, %c0_21, %c0_22] : memref<1x1x8xf32, #tpu.memory_space<vmem>>, vector<1x1x8xf32>
    %20 = vector.shape_cast %19 : vector<1x1x8xf32> to vector<1x8xf32>
    %21 = vector.broadcast %20 : vector<1x8xf32> to vector<8x8xf32>
    %22 = arith.addf %18, %21 : vector<8x8xf32>
    %cst_23 = arith.constant dense<0xFF800000> : vector<8xf32>
    %23 = vector.multi_reduction <maximumf>, %22, %cst_23 [1] : vector<8x8xf32> to vector<8xf32>
    %24 = vector.shape_cast %23 : vector<8xf32> to vector<8x1xf32>
    %25 = vector.broadcast %24 : vector<8x1xf32> to vector<8x8xf32>
    %26 = arith.subf %22, %25 : vector<8x8xf32>
    %27 = math.exp %26 : vector<8x8xf32>
    %cst_24 = arith.constant dense<0.000000e+00> : vector<8xf32>
    %28 = vector.multi_reduction <add>, %27, %cst_24 [1] : vector<8x8xf32> to vector<8xf32>
    %29 = vector.shape_cast %28 : vector<8xf32> to vector<8x1xf32>
    %30 = tpu.reciprocal %29 {approx = true} : vector<8x1xf32> -> vector<8x1xf32>
    %31 = vector.broadcast %30 : vector<8x1xf32> to vector<8x8xf32>
    %32 = arith.mulf %27, %31 : vector<8x8xf32>
    %33 = arith.truncf %32 : vector<8x8xf32> to vector<8x8xbf16>
    %cst_25 = arith.constant dense<0.000000e+00> : vector<8x32xf32>
    %34 = tpu.matmul %33, %17, %cst_25 {dimension_numbers = #tpu.dot_dimension_numbers<[1], [0], [0], [1], [0, 0, 1, 1], [], []>} : vector<8x8xbf16>, vector<8x32xbf16>, vector<8x32xf32> -> vector<8x32xf32>
    %35 = arith.truncf %34 : vector<8x32xf32> to vector<8x32xbf16>
    %c0_26 = arith.constant 0 : index
    %c0_27 = arith.constant 0 : index
    %c0_28 = arith.constant 0 : index
    %36 = vector.load %arg9[%c0_26, %c0_27, %c0_28] : memref<1x32x128xbf16, #tpu.memory_space<vmem>>, vector<1x32x128xbf16>
    %37 = vector.shape_cast %36 : vector<1x32x128xbf16> to vector<32x128xbf16>
    %cst_29 = arith.constant dense<0.000000e+00> : vector<8x128xf32>
    %38 = tpu.matmul %35, %37, %cst_29 {dimension_numbers = #tpu.dot_dimension_numbers<[1], [0], [0], [1], [0, 0, 1, 1], [], []>} : vector<8x32xbf16>, vector<32x128xbf16>, vector<8x128xf32> -> vector<8x128xf32>
    %c0_i32 = arith.constant 0 : i32
    %39 = arith.cmpi eq, %arg2, %c0_i32 : i32
    %40 = arith.extui %39 : i1 to i32
    %c0_i32_30 = arith.constant 0 : i32
    %41 = arith.cmpi ne, %40, %c0_i32_30 : i32
    scf.if %41 {
      %c0_33 = arith.constant 0 : index
      %c0_34 = arith.constant 0 : index
      %45 = vector.load %arg10[%c0_33, %c0_34] : memref<1x128xf32, #tpu.memory_space<vmem>>, vector<1x128xf32>
      %46 = vector.broadcast %45 : vector<1x128xf32> to vector<8x128xf32>
      %47 = arith.addf %38, %46 : vector<8x128xf32>
      %c0_35 = arith.constant 0 : index
      %c0_36 = arith.constant 0 : index
      %c0_37 = arith.constant 0 : index
      %48 = vector.load %arg11[%c0_35, %c0_36, %c0_37] : memref<1x8x128xf32, #tpu.memory_space<vmem>>, vector<1x8x128xf32>
      %49 = vector.shape_cast %48 : vector<1x8x128xf32> to vector<8x128xf32>
      %50 = vector.shape_cast %47 : vector<8x128xf32> to vector<1x8x128xf32>
      tpu.vector_store %arg11[%c0_35, %c0_36, %c0_37], %50 {strides = array<i32>} : memref<1x8x128xf32, #tpu.memory_space<vmem>>, vector<1x8x128xf32>,
    } else {
    }
    %c0_i32_31 = arith.constant 0 : i32
    %42 = arith.cmpi ne, %arg2, %c0_i32_31 : i32
    %43 = arith.extui %42 : i1 to i32
    %c0_i32_32 = arith.constant 0 : i32
    %44 = arith.cmpi ne, %43, %c0_i32_32 : i32
    scf.if %44 {
      %c0_33 = arith.constant 0 : index
      %c0_34 = arith.constant 0 : index
      %c0_35 = arith.constant 0 : index
      %45 = vector.load %arg11[%c0_33, %c0_34, %c0_35] : memref<1x8x128xf32, #tpu.memory_space<vmem>>, vector<1x8x128xf32>
      %46 = vector.shape_cast %45 : vector<1x8x128xf32> to vector<8x128xf32>
      %47 = arith.addf %46, %38 : vector<8x128xf32>
      %c0_36 = arith.constant 0 : index
      %c0_37 = arith.constant 0 : index
      %c0_38 = arith.constant 0 : index
      %48 = vector.load %arg11[%c0_36, %c0_37, %c0_38] : memref<1x8x128xf32, #tpu.memory_space<vmem>>, vector<1x8x128xf32>
      %49 = vector.shape_cast %48 : vector<1x8x128xf32> to vector<8x128xf32>
      %50 = vector.shape_cast %47 : vector<8x128xf32> to vector<1x8x128xf32>
      tpu.vector_store %arg11[%c0_36, %c0_37, %c0_38], %50 {strides = array<i32>} : memref<1x8x128xf32, #tpu.memory_space<vmem>>, vector<1x8x128xf32>,
    } else {
    }
    return
  }
  func.func @transform_0(%arg0: i32, %arg1: i32, %arg2: i32) -> (i32, i32, i32) {
    %c0_i32 = arith.constant 0 : i32
    %c0_i32_0 = arith.constant 0 : i32
    return %arg0, %arg1, %c0_i32 : i32, i32, i32
  }
  func.func @transform_1(%arg0: i32, %arg1: i32, %arg2: i32) -> (i32, i32, i32) {
    %c0_i32 = arith.constant 0 : i32
    %c0_i32_0 = arith.constant 0 : i32
    %c0_i32_1 = arith.constant 0 : i32
    return %arg0, %c0_i32, %c0_i32_0 : i32, i32, i32
  }
  func.func @transform_2(%arg0: i32, %arg1: i32, %arg2: i32) -> (i32, i32, i32) {
    %c0_i32 = arith.constant 0 : i32
    %c0_i32_0 = arith.constant 0 : i32
    %c0_i32_1 = arith.constant 0 : i32
    return %arg2, %c0_i32, %c0_i32_0 : i32, i32, i32
  }
  func.func @transform_3(%arg0: i32, %arg1: i32, %arg2: i32) -> (i32, i32, i32) {
    %c0_i32 = arith.constant 0 : i32
    %c0_i32_0 = arith.constant 0 : i32
    %c0_i32_1 = arith.constant 0 : i32
    return %arg2, %c0_i32, %c0_i32_0 : i32, i32, i32
  }
  func.func @transform_4(%arg0: i32, %arg1: i32, %arg2: i32) -> (i32, i32, i32) {
    %c0_i32 = arith.constant 0 : i32
    %c0_i32_0 = arith.constant 0 : i32
    %c0_i32_1 = arith.constant 0 : i32
    return %arg2, %c0_i32, %c0_i32_0 : i32, i32, i32
  }
  func.func @transform_5(%arg0: i32, %arg1: i32, %arg2: i32) -> (i32, i32, i32) {
    %c0_i32 = arith.constant 0 : i32
    %c0_i32_0 = arith.constant 0 : i32
    %c0_i32_1 = arith.constant 0 : i32
    return %arg0, %c0_i32, %c0_i32_0 : i32, i32, i32
  }
  func.func @transform_6(%arg0: i32, %arg1: i32, %arg2: i32) -> (i32, i32, i32) {
    %c0_i32 = arith.constant 0 : i32
    %c0_i32_0 = arith.constant 0 : i32
    %c0_i32_1 = arith.constant 0 : i32
    return %arg2, %c0_i32, %c0_i32_0 : i32, i32, i32
  }
  func.func @transform_7(%arg0: i32, %arg1: i32, %arg2: i32) -> (i32, i32) {
    %c0_i32 = arith.constant 0 : i32
    %c0_i32_0 = arith.constant 0 : i32
    %c0_i32_1 = arith.constant 0 : i32
    return %c0_i32, %c0_i32_0 : i32, i32
  }
  func.func @transform_8(%arg0: i32, %arg1: i32, %arg2: i32) -> (i32, i32, i32) {
    %c0_i32 = arith.constant 0 : i32
    %c0_i32_0 = arith.constant 0 : i32
    return %arg0, %arg1, %c0_i32 : i32, i32, i32
  }
}

</mosaic_0001>

<llo_original>
// kernel: tpu_custom_call.1
$region0: #{tpu_custom_call.1}
  #allocation0 [shape = 'u32[]', space=smem, size = 0x4, offset = 0x4, fixed_abs, tag = 'smem constant byte address 0x4 - core index']
  #allocation1 [shape = 'u32[72,128]{1,0:T(1,128)}', space=vmem, size = 0x9000, scoped, tag = 'internal scratch']
  %s0 = inlined_call_operand.vmem [shape: bf16[2,8,128], index: 0, kind: input, shape index: {}]
  %s1 = inlined_call_operand.vmem [shape: bf16[2,8,128], index: 1, kind: input, shape index: {}]
  %s2 = inlined_call_operand.vmem [shape: bf16[4,128,32], index: 2, kind: input, shape index: {}]
  %s3 = inlined_call_operand.vmem [shape: bf16[4,128,32], index: 3, kind: input, shape index: {}]
  %s4 = inlined_call_operand.vmem [shape: bf16[4,128,32], index: 4, kind: input, shape index: {}]
  %s5 = inlined_call_operand.vmem [shape: f32[2,1,8], index: 5, kind: input, shape index: {}]
  %s6 = inlined_call_operand.vmem [shape: bf16[4,32,128], index: 6, kind: input, shape index: {}]
  %s7 = inlined_call_operand.vmem [shape: f32[1,128], index: 7, kind: input, shape index: {}]
  %s8 = inlined_call_operand.hbm [shape: f32[2,8,128], index: 8, kind: output, shape index: {}]
  %s9 = sld [smem:[#allocation0]]
  $region73: #{tpu_custom_call.1} parent=0
    _
  %s11 = ssub.s32 1, %s9
  %s12 = scalar_select 0, %s11, %s9
  $region1: #{tpu_custom_call.1} parent=0
    #allocation2 [shape = 'u8[8192]{0}', space=vmem, size = 0x2000, scoped, tag = 'output window, operand 0']
    #allocation3 [shape = 's32[2]{0}', space=sflag, size = 0x8, scoped, tag = 'scoped memory for tpu_custom_call.1']
    %13 = vsyncpa [#allocation3], 0
    %s14 = scalar_lea.sflag [#allocation3], 1
    %15 = vsyncpa %s14, 0
    loop: start=0, step=1, limit=10
    $region2: #{tpu_custom_call.1} parent=1 // loop_pre_header
      _
    $region3: #{tpu_custom_call.1} parent=1 // loop_header
      %s17 = sphi 0, %s21
      %p18 = scmp.ge.s32.totalorder %s17, 10
      %s24 = sphi 0, %s43
      %s25 = sphi 0, %s39
      %s26 = sphi 0, %s35
      %s27 = sphi 0, %s24
      %s28 = sphi 0, %s25
      %s29 = sphi 0, %s26
      %s30 = sphi 0, %s27
      %s31 = sphi 0, %s28
      %s32 = sphi 0, %s29
      %s48 = sphi 0, %s50
      %s51 = sphi 0, %s48
      %s52 = sphi 0, %s51
      %s68 = sphi 0, %s52
      %s74 = sphi 0, %s76
      %s77 = sphi 0, %s74
      %s78 = sphi 0, %s77
      %s94 = sphi 0, %s78
      %s100 = sphi 0, %s102
      %s103 = sphi 0, %s100
      %s104 = sphi 0, %s103
      %s120 = sphi 0, %s104
      %s126 = sphi 0, %s128
      %s129 = sphi 0, %s126
      %s130 = sphi 0, %s129
      %s146 = sphi 0, %s130
      %s152 = sphi 0, %s154
      %s155 = sphi 0, %s152
      %s156 = sphi 0, %s155
      %s172 = sphi 0, %s156
      %s178 = sphi 0, %s180
      %s181 = sphi 0, %s178
      %s182 = sphi 0, %s181
      %s198 = sphi 0, %s182
      %s204 = sphi 0, %s206
      %s207 = sphi 0, %s204
      %s208 = sphi 0, %s207
      %s224 = sphi 0, %s208
      %s228 = sphi 0, %s228
      %s230 = sphi 0, %s228
      %s231 = sphi 0, %s230
      %s245 = sphi 0, %s231
      %s253 = sphi 0, %s255
      %s256 = sphi 0, %s253
      %s257 = sphi 0, %s256
      %s273 = sphi 0, %s257
    $region4: #{tpu_custom_call.1} parent=1 // loop_header_branch
      %20 = sbr.rel (%p18) target = $region8
    $region5: #{tpu_custom_call.1} parent=1 // loop_body
      %s22 = ssub.s32 %s17, 1
      %s23 = ssub.s32 %s17, 2
      %s33 = sadd.s32 1, %s26
      %p34 = scmp.ge.s32.totalorder %s33, 4
      %s35 = scalar_select %p34, 0, %s33
      %s36 = sadd.s32 1, %s25
      %s37 = scalar_select %p34, %s36, %s25
      %p38 = scmp.ge.s32.totalorder %s37, 1
      %s39 = scalar_select %p38, 0, %s37
      %s40 = sadd.s32 1, %s24
      %s41 = scalar_select %p38, %s40, %s24
      %p42 = scmp.ge.s32.totalorder %s41, 2
      %s43 = scalar_select %p42, 0, %s41
      %s44 = ssub.s32 %s24, %s43
      %s45 = ssub.s32 %s25, %s39
      %s46 = sor.u32 %s44, %s45
      %p47 = scmp.eq.s32.totalorder %s46, 0
      %s49 = sadd.s32 %s48, 1
      %s50 = scalar_select %p47, %s48, %s49
      %p53 = pneg %p47
      %p54 = scmp.eq.s32.totalorder %s17, 7
      %p55 = por %p53, %p54
      %p56 = scmp.ne.s32.totalorder %s48, %s51
      %p57 = scmp.eq.s32.totalorder %s17, 0
      %p58 = por %p56, %p57
      %p59 = scmp.ne.s32.totalorder %s48, %s51
      %p60 = scmp.eq.s32.totalorder %s22, 7
      %p61 = por %p59, %p60
      %p62 = scmp.ne.s32.totalorder %s51, %s52
      %p63 = scmp.eq.s32.totalorder %s22, 0
      %p64 = por %p62, %p63
      %p65 = scmp.ne.s32.totalorder %s51, %s52
      %p66 = scmp.eq.s32.totalorder %s23, 7
      %p67 = por %p65, %p66
      %p69 = scmp.ne.s32.totalorder %s52, %s68
      %p70 = scmp.eq.s32.totalorder %s23, 0
      %p71 = por %p69, %p70
      %s72 = ssub.s32 %s24, %s43
      %p73 = scmp.eq.s32.totalorder %s72, 0
      %s75 = sadd.s32 %s74, 1
      %s76 = scalar_select %p73, %s74, %s75
      %p79 = pneg %p73
      %p80 = scmp.eq.s32.totalorder %s17, 7
      %p81 = por %p79, %p80
      %p82 = scmp.ne.s32.totalorder %s74, %s77
      %p83 = scmp.eq.s32.totalorder %s17, 0
      %p84 = por %p82, %p83
      %p85 = scmp.ne.s32.totalorder %s74, %s77
      %p86 = scmp.eq.s32.totalorder %s22, 7
      %p87 = por %p85, %p86
      %p88 = scmp.ne.s32.totalorder %s77, %s78
      %p89 = scmp.eq.s32.totalorder %s22, 0
      %p90 = por %p88, %p89
      %p91 = scmp.ne.s32.totalorder %s77, %s78
      %p92 = scmp.eq.s32.totalorder %s23, 7
      %p93 = por %p91, %p92
      %p95 = scmp.ne.s32.totalorder %s78, %s94
      %p96 = scmp.eq.s32.totalorder %s23, 0
      %p97 = por %p95, %p96
      %s98 = ssub.s32 %s26, %s35
      %p99 = scmp.eq.s32.totalorder %s98, 0
      %s101 = sadd.s32 %s100, 1
      %s102 = scalar_select %p99, %s100, %s101
      %p105 = pneg %p99
      %p106 = scmp.eq.s32.totalorder %s17, 7
      %p107 = por %p105, %p106
      %p108 = scmp.ne.s32.totalorder %s100, %s103
      %p109 = scmp.eq.s32.totalorder %s17, 0
      %p110 = por %p108, %p109
      %p111 = scmp.ne.s32.totalorder %s100, %s103
      %p112 = scmp.eq.s32.totalorder %s22, 7
      %p113 = por %p111, %p112
      %p114 = scmp.ne.s32.totalorder %s103, %s104
      %p115 = scmp.eq.s32.totalorder %s22, 0
      %p116 = por %p114, %p115
      %p117 = scmp.ne.s32.totalorder %s103, %s104
      %p118 = scmp.eq.s32.totalorder %s23, 7
      %p119 = por %p117, %p118
      %p121 = scmp.ne.s32.totalorder %s104, %s120
      %p122 = scmp.eq.s32.totalorder %s23, 0
      %p123 = por %p121, %p122
      %s124 = ssub.s32 %s26, %s35
      %p125 = scmp.eq.s32.totalorder %s124, 0
      %s127 = sadd.s32 %s126, 1
      %s128 = scalar_select %p125, %s126, %s127
      %p131 = pneg %p125
      %p132 = scmp.eq.s32.totalorder %s17, 7
      %p133 = por %p131, %p132
      %p134 = scmp.ne.s32.totalorder %s126, %s129
      %p135 = scmp.eq.s32.totalorder %s17, 0
      %p136 = por %p134, %p135
      %p137 = scmp.ne.s32.totalorder %s126, %s129
      %p138 = scmp.eq.s32.totalorder %s22, 7
      %p139 = por %p137, %p138
      %p140 = scmp.ne.s32.totalorder %s129, %s130
      %p141 = scmp.eq.s32.totalorder %s22, 0
      %p142 = por %p140, %p141
      %p143 = scmp.ne.s32.totalorder %s129, %s130
      %p144 = scmp.eq.s32.totalorder %s23, 7
      %p145 = por %p143, %p144
      %p147 = scmp.ne.s32.totalorder %s130, %s146
      %p148 = scmp.eq.s32.totalorder %s23, 0
      %p149 = por %p147, %p148
      %s150 = ssub.s32 %s26, %s35
      %p151 = scmp.eq.s32.totalorder %s150, 0
      %s153 = sadd.s32 %s152, 1
      %s154 = scalar_select %p151, %s152, %s153
      %p157 = pneg %p151
      %p158 = scmp.eq.s32.totalorder %s17, 7
      %p159 = por %p157, %p158
      %p160 = scmp.ne.s32.totalorder %s152, %s155
      %p161 = scmp.eq.s32.totalorder %s17, 0
      %p162 = por %p160, %p161
      %p163 = scmp.ne.s32.totalorder %s152, %s155
      %p164 = scmp.eq.s32.totalorder %s22, 7
      %p165 = por %p163, %p164
      %p166 = scmp.ne.s32.totalorder %s155, %s156
      %p167 = scmp.eq.s32.totalorder %s22, 0
      %p168 = por %p166, %p167
      %p169 = scmp.ne.s32.totalorder %s155, %s156
      %p170 = scmp.eq.s32.totalorder %s23, 7
      %p171 = por %p169, %p170
      %p173 = scmp.ne.s32.totalorder %s156, %s172
      %p174 = scmp.eq.s32.totalorder %s23, 0
      %p175 = por %p173, %p174
      %s176 = ssub.s32 %s24, %s43
      %p177 = scmp.eq.s32.totalorder %s176, 0
      %s179 = sadd.s32 %s178, 1
      %s180 = scalar_select %p177, %s178, %s179
      %p183 = pneg %p177
      %p184 = scmp.eq.s32.totalorder %s17, 7
      %p185 = por %p183, %p184
      %p186 = scmp.ne.s32.totalorder %s178, %s181
      %p187 = scmp.eq.s32.totalorder %s17, 0
      %p188 = por %p186, %p187
      %p189 = scmp.ne.s32.totalorder %s178, %s181
      %p190 = scmp.eq.s32.totalorder %s22, 7
      %p191 = por %p189, %p190
      %p192 = scmp.ne.s32.totalorder %s181, %s182
      %p193 = scmp.eq.s32.totalorder %s22, 0
      %p194 = por %p192, %p193
      %p195 = scmp.ne.s32.totalorder %s181, %s182
      %p196 = scmp.eq.s32.totalorder %s23, 7
      %p197 = por %p195, %p196
      %p199 = scmp.ne.s32.totalorder %s182, %s198
      %p200 = scmp.eq.s32.totalorder %s23, 0
      %p201 = por %p199, %p200
      %s202 = ssub.s32 %s26, %s35
      %p203 = scmp.eq.s32.totalorder %s202, 0
      %s205 = sadd.s32 %s204, 1
      %s206 = scalar_select %p203, %s204, %s205
      %p209 = pneg %p203
      %p210 = scmp.eq.s32.totalorder %s17, 7
      %p211 = por %p209, %p210
      %p212 = scmp.ne.s32.totalorder %s204, %s207
      %p213 = scmp.eq.s32.totalorder %s17, 0
      %p214 = por %p212, %p213
      %p215 = scmp.ne.s32.totalorder %s204, %s207
      %p216 = scmp.eq.s32.totalorder %s22, 7
      %p217 = por %p215, %p216
      %p218 = scmp.ne.s32.totalorder %s207, %s208
      %p219 = scmp.eq.s32.totalorder %s22, 0
      %p220 = por %p218, %p219
      %p221 = scmp.ne.s32.totalorder %s207, %s208
      %p222 = scmp.eq.s32.totalorder %s23, 7
      %p223 = por %p221, %p222
      %p225 = scmp.ne.s32.totalorder %s208, %s224
      %p226 = scmp.eq.s32.totalorder %s23, 0
      %p227 = por %p225, %p226
      %s229 = sadd.s32 %s228, 1
      %p232 = scmp.eq.s32.totalorder %s17, 7
      %p233 = scmp.ne.s32.totalorder %s228, %s230
      %p234 = scmp.eq.s32.totalorder %s17, 0
      %p235 = por %p233, %p234
      %p236 = scmp.ne.s32.totalorder %s228, %s230
      %p237 = scmp.eq.s32.totalorder %s22, 7
      %p238 = por %p236, %p237
      %p239 = scmp.ne.s32.totalorder %s230, %s231
      %p240 = scmp.eq.s32.totalorder %s22, 0
      %p241 = por %p239, %p240
      %p242 = scmp.ne.s32.totalorder %s230, %s231
      %p243 = scmp.eq.s32.totalorder %s23, 7
      %p244 = por %p242, %p243
      %p246 = scmp.ne.s32.totalorder %s231, %s245
      %p247 = scmp.eq.s32.totalorder %s23, 0
      %p248 = por %p246, %p247
      %s249 = ssub.s32 %s24, %s43
      %s250 = ssub.s32 %s25, %s39
      %s251 = sor.u32 %s249, %s250
      %p252 = scmp.eq.s32.totalorder %s251, 0
      %s254 = sadd.s32 %s253, 1
      %s255 = scalar_select %p252, %s253, %s254
      %p258 = pneg %p252
      %p259 = scmp.eq.s32.totalorder %s17, 7
      %p260 = por %p258, %p259
      %p261 = scmp.ne.s32.totalorder %s253, %s256
      %p262 = scmp.eq.s32.totalorder %s17, 0
      %p263 = por %p261, %p262
      %p264 = scmp.ne.s32.totalorder %s253, %s256
      %p265 = scmp.eq.s32.totalorder %s22, 7
      %p266 = por %p264, %p265
      %p267 = scmp.ne.s32.totalorder %s256, %s257
      %p268 = scmp.eq.s32.totalorder %s22, 0
      %p269 = por %p267, %p268
      %p270 = scmp.ne.s32.totalorder %s256, %s257
      %p271 = scmp.eq.s32.totalorder %s23, 7
      %p272 = por %p270, %p271
      %p274 = scmp.ne.s32.totalorder %s257, %s273
      %p275 = scmp.eq.s32.totalorder %s23, 0
      %p276 = por %p274, %p275
      %p277 = scmp.le.s32.totalorder 1, %s17
      %p278 = scmp.lt.s32.totalorder %s17, 9
      %p279 = pnand %p277, %p278
      %p280 = pneg %p279
      // Predicated region
      $region9: #{tpu_custom_call.1} parent=5 // pred_check
        _
      $region10: #{tpu_custom_call.1} parent=5 // pred_check_branch
        %282 = sbr.rel (%p279) target = $region12
      $region11: #{tpu_custom_call.1} parent=5 // pred_region
        %s283 = ssub.s32 %s17, 1
        // Predicated region
        $region13: #{tpu_custom_call.1} parent=11 // pred_check
          %p284 = pneg %p241
        $region14: #{tpu_custom_call.1} parent=11 // pred_check_branch
          %286 = sbr.rel (%p284) target = $region16
        $region15: #{tpu_custom_call.1} parent=11 // pred_region
          _
        $region16: #{tpu_custom_call.1} parent=11 // pred_fallthru
          _
      $region12: #{tpu_custom_call.1} parent=5 // pred_fallthru
        _
      %p287 = scmp.lt.s32.totalorder %s17, 8
      // Predicated region
      $region17: #{tpu_custom_call.1} parent=5 // pred_check
        %p288 = pneg %p287
      $region18: #{tpu_custom_call.1} parent=5 // pred_check_branch
        %290 = sbr.rel (%p288) target = $region20
      $region19: #{tpu_custom_call.1} parent=5 // pred_region
        // Predicated region
        $region21: #{tpu_custom_call.1} parent=19 // pred_check
          %p291 = pneg %p58
        $region22: #{tpu_custom_call.1} parent=19 // pred_check_branch
          %293 = sbr.rel (%p291) target = $region24
        $region23: #{tpu_custom_call.1} parent=19 // pred_region
          %p294 = scmp.lt.s32.totalorder %s24, 1
          %s295 = scalar_select %p294, %s24, 1
          %p296 = scmp.lt.s32.totalorder %s25, 0
          %s297 = scalar_select %p296, %s25, 0
          %s298 = sadd.s32 %s297, %s295
          %s299 = smul.addr %s298, 4
          %s300 = scalar_lea.vmem %s0, %s299
        $region24: #{tpu_custom_call.1} parent=19 // pred_fallthru
          _
        // Predicated region
        $region25: #{tpu_custom_call.1} parent=19 // pred_check
          %p301 = pneg %p84
        $region26: #{tpu_custom_call.1} parent=19 // pred_check_branch
          %303 = sbr.rel (%p301) target = $region28
        $region27: #{tpu_custom_call.1} parent=19 // pred_region
          %p304 = scmp.lt.s32.totalorder %s24, 1
          %s305 = scalar_select %p304, %s24, 1
          %s306 = smul.addr %s305, 4
          %s307 = scalar_lea.vmem %s1, %s306
        $region28: #{tpu_custom_call.1} parent=19 // pred_fallthru
          _
        // Predicated region
        $region29: #{tpu_custom_call.1} parent=19 // pred_check
          %p308 = pneg %p110
        $region30: #{tpu_custom_call.1} parent=19 // pred_check_branch
          %310 = sbr.rel (%p308) target = $region32
        $region31: #{tpu_custom_call.1} parent=19 // pred_region
          %p311 = scmp.lt.s32.totalorder %s26, 3
          %s312 = scalar_select %p311, %s26, 3
          %s313 = smul.addr %s312, 16
          %s314 = smul.addr %s313, 4
          %s315 = scalar_lea.vmem %s2, %s314
        $region32: #{tpu_custom_call.1} parent=19 // pred_fallthru
          _
        // Predicated region
        $region33: #{tpu_custom_call.1} parent=19 // pred_check
          %p316 = pneg %p136
        $region34: #{tpu_custom_call.1} parent=19 // pred_check_branch
          %318 = sbr.rel (%p316) target = $region36
        $region35: #{tpu_custom_call.1} parent=19 // pred_region
          %p319 = scmp.lt.s32.totalorder %s26, 3
          %s320 = scalar_select %p319, %s26, 3
          %s321 = smul.addr %s320, 16
          %s322 = smul.addr %s321, 4
          %s323 = scalar_lea.vmem %s3, %s322
        $region36: #{tpu_custom_call.1} parent=19 // pred_fallthru
          _
        // Predicated region
        $region37: #{tpu_custom_call.1} parent=19 // pred_check
          %p324 = pneg %p162
        $region38: #{tpu_custom_call.1} parent=19 // pred_check_branch
          %326 = sbr.rel (%p324) target = $region40
        $region39: #{tpu_custom_call.1} parent=19 // pred_region
          %p327 = scmp.lt.s32.totalorder %s26, 3
          %s328 = scalar_select %p327, %s26, 3
          %s329 = smul.addr %s328, 16
          %s330 = smul.addr %s329, 4
          %s331 = scalar_lea.vmem %s4, %s330
        $region40: #{tpu_custom_call.1} parent=19 // pred_fallthru
          _
        // Predicated region
        $region41: #{tpu_custom_call.1} parent=19 // pred_check
          %p332 = pneg %p188
        $region42: #{tpu_custom_call.1} parent=19 // pred_check_branch
          %334 = sbr.rel (%p332) target = $region44
        $region43: #{tpu_custom_call.1} parent=19 // pred_region
          %p335 = scmp.lt.s32.totalorder %s24, 1
          %s336 = scalar_select %p335, %s24, 1
          %s337 = scalar_lea.vmem %s5, %s336
        $region44: #{tpu_custom_call.1} parent=19 // pred_fallthru
          _
        // Predicated region
        $region45: #{tpu_custom_call.1} parent=19 // pred_check
          %p338 = pneg %p214
        $region46: #{tpu_custom_call.1} parent=19 // pred_check_branch
          %340 = sbr.rel (%p338) target = $region48
        $region47: #{tpu_custom_call.1} parent=19 // pred_region
          %p341 = scmp.lt.s32.totalorder %s26, 3
          %s342 = scalar_select %p341, %s26, 3
          %s343 = smul.addr %s342, 4
          %s344 = smul.addr %s343, 4
          %s345 = scalar_lea.vmem %s6, %s344
        $region48: #{tpu_custom_call.1} parent=19 // pred_fallthru
          _
      $region20: #{tpu_custom_call.1} parent=5 // pred_fallthru
        _
      %p346 = scmp.le.s32.totalorder 1, %s17
      %p347 = scmp.lt.s32.totalorder %s17, 9
      %p348 = pnand %p346, %p347
      %p349 = pneg %p348
      // Predicated region
      $region49: #{tpu_custom_call.1} parent=5 // pred_check
        _
      $region50: #{tpu_custom_call.1} parent=5 // pred_check_branch
        %351 = sbr.rel (%p348) target = $region52
      $region51: #{tpu_custom_call.1} parent=5 // pred_region
        %s352 = ssub.s32 %s17, 1
        %p353 = scmp.lt.s32.totalorder %s27, 1
        %s354 = scalar_select %p353, %s27, 1
        %p355 = scmp.lt.s32.totalorder %s28, 0
        %s356 = scalar_select %p355, %s28, 0
        %s357 = sadd.s32 %s356, %s354
        %s358 = smul.addr %s357, 4
        %s359 = scalar_lea.vmem %s0, %s358
        %p360 = pneg %p64
        %p361 = pneg %p61
        %p362 = scmp.lt.s32.totalorder %s27, 1
        %s363 = scalar_select %p362, %s27, 1
        %s364 = smul.addr %s363, 4
        %s365 = scalar_lea.vmem %s1, %s364
        %p366 = pneg %p90
        %p367 = pneg %p87
        %p368 = scmp.lt.s32.totalorder %s29, 3
        %s369 = scalar_select %p368, %s29, 3
        %s370 = smul.addr %s369, 16
        %s371 = smul.addr %s370, 4
        %s372 = scalar_lea.vmem %s2, %s371
        %p373 = pneg %p116
        %p374 = pneg %p113
        %p375 = scmp.lt.s32.totalorder %s29, 3
        %s376 = scalar_select %p375, %s29, 3
        %s377 = smul.addr %s376, 16
        %s378 = smul.addr %s377, 4
        %s379 = scalar_lea.vmem %s3, %s378
        %p380 = pneg %p142
        %p381 = pneg %p139
        %p382 = scmp.lt.s32.totalorder %s29, 3
        %s383 = scalar_select %p382, %s29, 3
        %s384 = smul.addr %s383, 16
        %s385 = smul.addr %s384, 4
        %s386 = scalar_lea.vmem %s4, %s385
        %p387 = pneg %p168
        %p388 = pneg %p165
        %p389 = scmp.lt.s32.totalorder %s27, 1
        %s390 = scalar_select %p389, %s27, 1
        %s391 = scalar_lea.vmem %s5, %s390
        %p392 = pneg %p194
        %p393 = pneg %p191
        %p394 = scmp.lt.s32.totalorder %s29, 3
        %s395 = scalar_select %p394, %s29, 3
        %s396 = smul.addr %s395, 4
        %s397 = smul.addr %s396, 4
        %s398 = scalar_lea.vmem %s6, %s397
        %p399 = pneg %p220
        %p400 = pneg %p217
        %p401 = pneg %p241
        %p402 = pneg %p238
        %p403 = pneg %p269
        %p404 = pneg %p266
        %s405 = sand.u32 %s256, 1
        %s406 = scalar_lea.sflag [#allocation3], %s405
        %s407 = sand.u32 %s256, 1
        %s408 = smul.addr %s407, 8
        %s409 = scalar_lea.vmem [#allocation2], %s408
        %p410 = scmp.lt.s32.totalorder %s27, 1
        %s411 = scalar_select %p410, %s27, 1
        %p412 = scmp.lt.s32.totalorder %s28, 0
        %s413 = scalar_select %p412, %s28, 0
        %s414 = sadd.s32 %s413, %s411
        %s415 = smul.addr %s414, 4
        %s416 = scalar_lea.vmem %s0, %s415
        %p417 = scmp.lt.s32.totalorder %s27, 1
        %s418 = scalar_select %p417, %s27, 1
        %s419 = smul.addr %s418, 4
        %s420 = scalar_lea.vmem %s1, %s419
        %p421 = scmp.lt.s32.totalorder %s29, 3
        %s422 = scalar_select %p421, %s29, 3
        %s423 = smul.addr %s422, 16
        %s424 = smul.addr %s423, 4
        %s425 = scalar_lea.vmem %s2, %s424
        %p426 = scmp.lt.s32.totalorder %s29, 3
        %s427 = scalar_select %p426, %s29, 3
        %s428 = smul.addr %s427, 16
        %s429 = smul.addr %s428, 4
        %s430 = scalar_lea.vmem %s3, %s429
        %p431 = scmp.lt.s32.totalorder %s29, 3
        %s432 = scalar_select %p431, %s29, 3
        %s433 = smul.addr %s432, 16
        %s434 = smul.addr %s433, 4
        %s435 = scalar_lea.vmem %s4, %s434
        %p436 = scmp.lt.s32.totalorder %s27, 1
        %s437 = scalar_select %p436, %s27, 1
        %s438 = scalar_lea.vmem %s5, %s437
        %p439 = scmp.lt.s32.totalorder %s29, 3
        %s440 = scalar_select %p439, %s29, 3
        %s441 = smul.addr %s440, 4
        %s442 = smul.addr %s441, 4
        %s443 = scalar_lea.vmem %s6, %s442
        %v445 = vld [vmem:[%s416] sm:$0xf]
        %v446 = vld [vmem:[%s425] sm:$0xf]
        %v447 = vld [vmem:[%s425 + $0x4] sm:$0xf]
        %v448 = vld [vmem:[%s425 + $0x8] sm:$0xf]
        %v449 = vld [vmem:[%s425 + $0xc] sm:$0xf]
        %v450 = vld [vmem:[%s425 + $0x10] sm:$0xf]
        %v451 = vld [vmem:[%s425 + $0x14] sm:$0xf]
        %v452 = vld [vmem:[%s425 + $0x18] sm:$0xf]
        %v453 = vld [vmem:[%s425 + $0x1c] sm:$0xf]
        %v454 = vld [vmem:[%s425 + $0x20] sm:$0xf]
        %v455 = vld [vmem:[%s425 + $0x24] sm:$0xf]
        %v456 = vld [vmem:[%s425 + $0x28] sm:$0xf]
        %v457 = vld [vmem:[%s425 + $0x2c] sm:$0xf]
        %v458 = vld [vmem:[%s425 + $0x30] sm:$0xf]
        %v459 = vld [vmem:[%s425 + $0x34] sm:$0xf]
        %v460 = vld [vmem:[%s425 + $0x38] sm:$0xf]
        %v461 = vld [vmem:[%s425 + $0x3c] sm:$0xf]
        %v478 = vunpack.c.l.b16 %v446
        %v479 = vunpack.c.l.b16 %v447
        %v480 = vunpack.c.l.b16 %v448
        %v481 = vunpack.c.l.b16 %v449
        %v482 = vunpack.c.l.b16 %v450
        %v483 = vunpack.c.l.b16 %v451
        %v484 = vunpack.c.l.b16 %v452
        %v485 = vunpack.c.l.b16 %v453
        %v486 = vunpack.c.l.b16 %v454
        %v487 = vunpack.c.l.b16 %v455
        %v488 = vunpack.c.l.b16 %v456
        %v489 = vunpack.c.l.b16 %v457
        %v490 = vunpack.c.l.b16 %v458
        %v491 = vunpack.c.l.b16 %v459
        %v492 = vunpack.c.l.b16 %v460
        %v493 = vunpack.c.l.b16 %v461
        %v494 = vpack.c.b16 %v479, %v478
        %v495 = vpack.c.b16 %v481, %v480
        %v496 = vpack.c.b16 %v483, %v482
        %v497 = vpack.c.b16 %v485, %v484
        %v498 = vpack.c.b16 %v487, %v486
        %v499 = vpack.c.b16 %v489, %v488
        %v500 = vpack.c.b16 %v491, %v490
        %v501 = vpack.c.b16 %v493, %v492
        %510 = vmatpush.bf16.msra.mxu0 %v501
        %511 = vmatpush.bf16.msra.mxu0 %v500
        %512 = vmatpush.bf16.msra.mxu0 %v499
        %513 = vmatpush.bf16.msra.mxu0 %v498
        %514 = vmatpush.bf16.msra.mxu0 %v497
        %515 = vmatpush.bf16.msra.mxu0 %v496
        %516 = vmatpush.bf16.msra.mxu0 %v495
        %517 = vmatpush.bf16.msra.mxu0 %v494
        %518 = vmatmul.bf16.gmra.mxu0 %v445
        %v519 = vpop.f32.mrf.mxu0
        %v520 = vadd.f32 0.0, %v519
        %v521 = vpop.f32.mrf.mxu0
        %522 = vdwg.mxu0
        %v523 = vpack.c.bf16 %v520, %v520
        %v524 = vld [vmem:[%s420] sm:$0xf]
        %v525 = vld [vmem:[%s430] sm:$0xf]
        %v526 = vld [vmem:[%s430 + $0x4] sm:$0xf]
        %v527 = vld [vmem:[%s430 + $0x8] sm:$0xf]
        %v528 = vld [vmem:[%s430 + $0xc] sm:$0xf]
        %v529 = vld [vmem:[%s430 + $0x10] sm:$0xf]
        %v530 = vld [vmem:[%s430 + $0x14] sm:$0xf]
        %v531 = vld [vmem:[%s430 + $0x18] sm:$0xf]
        %v532 = vld [vmem:[%s430 + $0x1c] sm:$0xf]
        %v533 = vld [vmem:[%s430 + $0x20] sm:$0xf]
        %v534 = vld [vmem:[%s430 + $0x24] sm:$0xf]
        %v535 = vld [vmem:[%s430 + $0x28] sm:$0xf]
        %v536 = vld [vmem:[%s430 + $0x2c] sm:$0xf]
        %v537 = vld [vmem:[%s430 + $0x30] sm:$0xf]
        %v538 = vld [vmem:[%s430 + $0x34] sm:$0xf]
        %v539 = vld [vmem:[%s430 + $0x38] sm:$0xf]
        %v540 = vld [vmem:[%s430 + $0x3c] sm:$0xf]
        %v557 = vunpack.c.l.b16 %v525
        %v558 = vunpack.c.l.b16 %v526
        %v559 = vunpack.c.l.b16 %v527
        %v560 = vunpack.c.l.b16 %v528
        %v561 = vunpack.c.l.b16 %v529
        %v562 = vunpack.c.l.b16 %v530
        %v563 = vunpack.c.l.b16 %v531
        %v564 = vunpack.c.l.b16 %v532
        %v565 = vunpack.c.l.b16 %v533
        %v566 = vunpack.c.l.b16 %v534
        %v567 = vunpack.c.l.b16 %v535
        %v568 = vunpack.c.l.b16 %v536
        %v569 = vunpack.c.l.b16 %v537
        %v570 = vunpack.c.l.b16 %v538
        %v571 = vunpack.c.l.b16 %v539
        %v572 = vunpack.c.l.b16 %v540
        %v573 = vpack.c.b16 %v558, %v557
        %v574 = vpack.c.b16 %v560, %v559
        %v575 = vpack.c.b16 %v562, %v561
        %v576 = vpack.c.b16 %v564, %v563
        %v577 = vpack.c.b16 %v566, %v565
        %v578 = vpack.c.b16 %v568, %v567
        %v579 = vpack.c.b16 %v570, %v569
        %v580 = vpack.c.b16 %v572, %v571
        %589 = vmatpush.bf16.msra.mxu0 %v580
        %590 = vmatpush.bf16.msra.mxu0 %v579
        %591 = vmatpush.bf16.msra.mxu0 %v578
        %592 = vmatpush.bf16.msra.mxu0 %v577
        %593 = vmatpush.bf16.msra.mxu0 %v576
        %594 = vmatpush.bf16.msra.mxu0 %v575
        %595 = vmatpush.bf16.msra.mxu0 %v574
        %596 = vmatpush.bf16.msra.mxu0 %v573
        %597 = vmatmul.bf16.gmra.mxu0 %v524
        %v598 = vpop.f32.mrf.mxu0
        %v599 = vadd.f32 0.0, %v598
        %v600 = vpop.f32.mrf.mxu0
        %601 = vdwg.mxu0
        %v602 = vpack.c.bf16 %v599, %v599
        %v603 = vld [vmem:[%s435] sm:$0xf]
        %v604 = vld [vmem:[%s435 + $0x4] sm:$0xf]
        %v605 = vld [vmem:[%s435 + $0x8] sm:$0xf]
        %v606 = vld [vmem:[%s435 + $0xc] sm:$0xf]
        %v607 = vld [vmem:[%s435 + $0x10] sm:$0xf]
        %v608 = vld [vmem:[%s435 + $0x14] sm:$0xf]
        %v609 = vld [vmem:[%s435 + $0x18] sm:$0xf]
        %v610 = vld [vmem:[%s435 + $0x1c] sm:$0xf]
        %v611 = vld [vmem:[%s435 + $0x20] sm:$0xf]
        %v612 = vld [vmem:[%s435 + $0x24] sm:$0xf]
        %v613 = vld [vmem:[%s435 + $0x28] sm:$0xf]
        %v614 = vld [vmem:[%s435 + $0x2c] sm:$0xf]
        %v615 = vld [vmem:[%s435 + $0x30] sm:$0xf]
        %v616 = vld [vmem:[%s435 + $0x34] sm:$0xf]
        %v617 = vld [vmem:[%s435 + $0x38] sm:$0xf]
        %v618 = vld [vmem:[%s435 + $0x3c] sm:$0xf]
        %v635 = vunpack.c.l.b16 %v603
        %v636 = vunpack.c.l.b16 %v604
        %v637 = vunpack.c.l.b16 %v605
        %v638 = vunpack.c.l.b16 %v606
        %v639 = vunpack.c.l.b16 %v607
        %v640 = vunpack.c.l.b16 %v608
        %v641 = vunpack.c.l.b16 %v609
        %v642 = vunpack.c.l.b16 %v610
        %v643 = vunpack.c.l.b16 %v611
        %v644 = vunpack.c.l.b16 %v612
        %v645 = vunpack.c.l.b16 %v613
        %v646 = vunpack.c.l.b16 %v614
        %v647 = vunpack.c.l.b16 %v615
        %v648 = vunpack.c.l.b16 %v616
        %v649 = vunpack.c.l.b16 %v617
        %v650 = vunpack.c.l.b16 %v618
        %v651 = vpack.c.b16 %v636, %v635
        %v652 = vpack.c.b16 %v638, %v637
        %v653 = vpack.c.b16 %v640, %v639
        %v654 = vpack.c.b16 %v642, %v641
        %v655 = vpack.c.b16 %v644, %v643
        %v656 = vpack.c.b16 %v646, %v645
        %v657 = vpack.c.b16 %v648, %v647
        %v658 = vpack.c.b16 %v650, %v649
        %667 = vmatpush.bf16.msra.mxu0 %v658
        %668 = vmatpush.bf16.msra.mxu0 %v657
        %669 = vmatpush.bf16.msra.mxu0 %v656
        %670 = vmatpush.bf16.msra.mxu0 %v655
        %671 = vmatpush.bf16.msra.mxu0 %v654
        %672 = vmatpush.bf16.msra.mxu0 %v653
        %673 = vmatpush.bf16.msra.mxu0 %v652
        %674 = vmatpush.bf16.msra.mxu0 %v651
        %675 = vmatmul.bf16.gmra.mxu0 %v524
        %v676 = vpop.f32.mrf.mxu0
        %v677 = vadd.f32 0.0, %v676
        %v678 = vpop.f32.mrf.mxu0
        %679 = vdwg.mxu0
        %v680 = vpack.c.bf16 %v677, %v677
        %v681 = vld [vmem:[%s438] sm:$0x1]
        %v683 = vperm.slane %v681, 0
        %vm685 = vcmask 261120
        %v687 = vsel %vm685, %v523, 0
        %v690 = vsel %vm685, %v602, 0
        %692 = vmatpush.bf16.xpose.msra.mxu0 0
        %693 = vmatpush.bf16.xpose.msra.mxu0 0
        %694 = vmatpush.bf16.xpose.msra.mxu0 0
        %695 = vmatpush.bf16.xpose.msra.mxu0 0
        %696 = vmatpush.bf16.xpose.msra.mxu0 0
        %697 = vmatpush.bf16.xpose.msra.mxu0 0
        %698 = vmatpush.bf16.xpose.msra.mxu0 0
        %699 = vmatpush.bf16.xpose.msra.mxu0 %v690
        %700 = vmatmul.bf16.gmra.mxu0 %v687
        %v701 = vpop.f32.mrf.mxu0
        %v702 = vadd.f32 %v683, %v701
        %v703 = vpop.f32.mrf.mxu0
        %704 = vdwg.mxu0
        %vm705 = vcmask 64512
        %v706 = vsel %vm705, %v702, -inf
        %707 = vmax.xlane.f32.xlu0 %v706
        %v708 = vpop.xlane.xlu0 %707
        %v709 = vsub.f32 %v702, %v708
        %v710 = vmul.f32 %v709, 1.442695
        %v711 = vpow.pop %v710
        %v712 = vsel %vm705, %v711, 0.0
        %713 = vadd.xlane.f32.xlu0 %v712
        %v714 = vpop.xlane.xlu0 %713
        %v715 = vrcp.pop %v714
        %v716 = vmul.f32 %v711, %v715
        %v717 = vpack.c.bf16 %v716, %v716
        %v719 = vsel %vm705, %v717, 0
        %vm721 = vcmask 1043456
        %v723 = vsel %vm721, %v680, 0
        %725 = vmatpush.bf16.msra.mxu0 0
        %726 = vmatpush.bf16.msra.mxu0 0
        %727 = vmatpush.bf16.msra.mxu0 0
        %728 = vmatpush.bf16.msra.mxu0 0
        %729 = vmatpush.bf16.msra.mxu0 0
        %730 = vmatpush.bf16.msra.mxu0 0
        %731 = vmatpush.bf16.msra.mxu0 0
        %732 = vmatpush.bf16.msra.mxu0 %v723
        %733 = vmatmul.bf16.gmra.mxu0 %v719
        %v734 = vpop.f32.mrf.mxu0
        %v735 = vadd.f32 0.0, %v734
        %v736 = vpop.f32.mrf.mxu0
        %737 = vdwg.mxu0
        %v738 = vpack.c.bf16 %v735, %v735
        %v739 = vld [vmem:[%s443] sm:$0xf]
        %v740 = vld [vmem:[%s443 + $0x4] sm:$0xf]
        %v741 = vld [vmem:[%s443 + $0x8] sm:$0xf]
        %v742 = vld [vmem:[%s443 + $0xc] sm:$0xf]
        %v747 = vunpack.c.l.b16 %v739
        %v748 = vunpack.c.l.b16 %v740
        %v749 = vunpack.c.l.b16 %v741
        %v750 = vunpack.c.l.b16 %v742
        %v751 = vpack.c.b16 %v748, %v747
        %v752 = vpack.c.b16 %v750, %v749
        %v756 = vsel %vm685, %v738, 0
        %758 = vmatpush.bf16.msra.mxu0 0
        %759 = vmatpush.bf16.msra.mxu0 0
        %760 = vmatpush.bf16.msra.mxu0 0
        %761 = vmatpush.bf16.msra.mxu0 0
        %762 = vmatpush.bf16.msra.mxu0 0
        %763 = vmatpush.bf16.msra.mxu0 0
        %764 = vmatpush.bf16.msra.mxu0 %v752
        %765 = vmatpush.bf16.msra.mxu0 %v751
        %766 = vmatmul.bf16.gmra.mxu0 %v756
        %v767 = vpop.f32.mrf.mxu0
        %v768 = vadd.f32 0.0, %v767
        %v769 = vpop.f32.mrf.mxu0
        %770 = vdwg.mxu0
        %p771 = scmp.eq.s32.totalorder %s29, 0
        // Predicated region
        $region53: #{tpu_custom_call.1} parent=51 // pred_check
          %p772 = pneg %p771
        $region54: #{tpu_custom_call.1} parent=51 // pred_check_branch
          %774 = sbr.rel (%p772) target = $region56
        $region55: #{tpu_custom_call.1} parent=51 // pred_region
          %v775 = vld [vmem:[%s7] sm:$0x1]
          %v777 = vperm.slane %v775, 0
          %v779 = vadd.f32 %v768, %v777
          %780 = vst [vmem:[%s409] sm:$0xff] %v779
        $region56: #{tpu_custom_call.1} parent=51 // pred_fallthru
          _
        %p781 = scmp.ne.s32.totalorder %s29, 0
        // Predicated region
        $region57: #{tpu_custom_call.1} parent=51 // pred_check
          %p782 = pneg %p781
        $region58: #{tpu_custom_call.1} parent=51 // pred_check_branch
          %784 = sbr.rel (%p782) target = $region60
        $region59: #{tpu_custom_call.1} parent=51 // pred_region
          %v785 = vld [vmem:[%s409] sm:$0xff]
          %v786 = vadd.f32 %v785, %v768
          %787 = vst [vmem:[%s409] sm:$0xff] %v786
        $region60: #{tpu_custom_call.1} parent=51 // pred_fallthru
          _
        %s788 = sand.u32 %s256, 1
        %s789 = scalar_lea.sflag [#allocation3], %s788
        %s790 = sand.u32 %s256, 1
        %s791 = smul.addr %s790, 8
        %s792 = scalar_lea.vmem [#allocation2], %s791
        // Predicated region
        $region61: #{tpu_custom_call.1} parent=51 // pred_check
          %p793 = pneg %p266
        $region62: #{tpu_custom_call.1} parent=51 // pred_check_branch
          %795 = sbr.rel (%p793) target = $region64
        $region63: #{tpu_custom_call.1} parent=51 // pred_region
          %797 = vsyncadd %s789, 0
          %s798 = sadd.s32 %s28, %s27
          %s799 = smul.addr %s798, 8
          %s800 = scalar_lea.hbm %s8, %s799
          %s802 = sshll.u32 %s792, 4
          %s803 = int_to_ptr.vmem [resolvable:$true] %s802
          %s804 = sshll.u32 %s800, 4
          %s805 = int_to_ptr.hbm [resolvable:$true] %s804
          %807 = dma.vmem_to_hbm [thread:$0]  %s803, 128, %s805, %s789
        $region64: #{tpu_custom_call.1} parent=51 // pred_fallthru
          _
      $region52: #{tpu_custom_call.1} parent=5 // pred_fallthru
        _
      %p808 = scmp.le.s32.totalorder 2, %s17
      // Predicated region
      $region65: #{tpu_custom_call.1} parent=5 // pred_check
        %p809 = pneg %p808
      $region66: #{tpu_custom_call.1} parent=5 // pred_check_branch
        %811 = sbr.rel (%p809) target = $region68
      $region67: #{tpu_custom_call.1} parent=5 // pred_region
        %s812 = ssub.s32 %s17, 2
        // Predicated region
        $region69: #{tpu_custom_call.1} parent=67 // pred_check
          %p813 = pneg %p272
        $region70: #{tpu_custom_call.1} parent=67 // pred_check_branch
          %815 = sbr.rel (%p813) target = $region72
        $region71: #{tpu_custom_call.1} parent=67 // pred_region
          %s816 = sand.u32 %s257, 1
          %s817 = scalar_lea.sflag [#allocation3], %s816
          %s818 = sand.u32 %s257, 1
          %s819 = smul.addr %s818, 8
          %s820 = scalar_lea.vmem [#allocation2], %s819
          %822 = dma.done %s817, 128
        $region72: #{tpu_custom_call.1} parent=67 // pred_fallthru
          _
      $region68: #{tpu_custom_call.1} parent=5 // pred_fallthru
        _
    $region6: #{tpu_custom_call.1} parent=1 // loop_footer
      %s21 = sadd.s32 1, %s17
    $region7: #{tpu_custom_call.1} parent=1 // loop_footer_branch
      %16 = sbr.rel target = $region3
    $region8: #{tpu_custom_call.1} parent=1 // loop_exit
      _
    %823 = vsyncpa [#allocation3], 1
    %s824 = scalar_lea.sflag [#allocation3], 1
    %825 = vsyncpa %s824, 1

</llo_original>
